<compile_context>
chip_gen: v5e
topology: v5e:2x2
jax: 0.10.0
libtpu: 0.0.40
codegen_flags: <defaults>
</compile_context>

<pallas_src>
import jax
import jax.numpy as jnp
from jax.experimental import pallas as pl
from jax.experimental.pallas import tpu as pltpu

EPS = 1e-5


def _bn_fold(gamma, beta, rmean, rvar):
    scale = gamma / jnp.sqrt(rvar + EPS)
    shift = beta - rmean * scale
    return scale, shift


def _vmem_budget_bytes():
    """VMEM byte budget for tiling (leaves headroom; respects v7x's 64 MiB)."""
    try:
        cap = int(pltpu.get_tpu_info().vmem_capacity_bytes)
    except Exception:                      # conservative fallback
        cap = 64 * 1024 * 1024
    return min(cap * 3 // 4, 100 * 1024 * 1024)


def _pick_tile(n, target, step=1):
    """Largest multiple-of-`step` divisor of n that is <= max(target, step).

    Falls back to the full extent n (never a degenerate 1-row tile) when no
    such divisor exists.
    TODO(synk): for awkward (prime-ish) extents a pl.cdiv grid with a masked
    tail tile would keep both VMEM and per-step overhead bounded.
    """
    target = max(int(target), step)
    if n <= target:
        return n
    best = None
    t = step
    while t <= target:
        if n % t == 0:
            best = t
        t += step
    return best if best is not None else n


# ---------------------------------------------------------------------------
# Kernel A: ConvTranspose2d(k=2, s=2) + BN(eval) + ReLU, one fused MXU matmul.
#   out[n, 2h+kh, 2w+kw, co] = sum_ci x[n, h, w, ci] * W[ci, co, kh, kw] + b
#   Output is produced directly as (N*H, 2, W, 2*Cout) so the 2x upsample is a
#   free row-major reshape in the wrapper.
# ---------------------------------------------------------------------------
def _upconv_kernel(x_ref, w_ref, s_ref, t_ref, o_ref):
    rows, w_in, cin = x_ref.shape
    c4 = w_ref.shape[-1]                   # 4*Cout, columns ordered (kh, kw, co)
    c2 = c4 // 2
    xf = x_ref[...].reshape(rows * w_in, cin)
    # One MXU pass with N = 4*Cout instead of two N = 2*Cout passes.
    acc = jnp.dot(xf, w_ref[...], preferred_element_type=jnp.float32)
    y = jnp.maximum(acc * s_ref[0] + t_ref[0], 0.0)       # fused BN + ReLU (f32)
    y = y.reshape(rows, w_in, c4)
    for kh in range(2):                    # split along lanes: (kh, kw*co)
        o_ref[:, kh, :, :] = y[:, :, kh * c2:(kh + 1) * c2].astype(o_ref.dtype)


def upconv2x2_bn_relu(x_nhwc, w, b, scale, shift, *, compute_dtype, out_dtype,
                      row_target=None, vmem_budget=None):
    """x: (N, H, W, Cin); w: (Cin, Cout, 2, 2) [PyTorch ConvTranspose2d]."""
    N, H, W, Cin = x_nhwc.shape
    Cout = w.shape[1]
    # (Cin, Cout, kh, kw) -> (Cin, kh, kw, Cout) -> (Cin, 4*Cout)
    wk = jnp.transpose(w, (0, 2, 3, 1)).reshape(Cin, 4 * Cout)
    wk = wk.astype(compute_dtype)
    s4 = jnp.tile(scale, 4)[None, :].astype(jnp.float32)
    # fold bias into the BN shift: (z + b)*s + t == z*s + (t + b*s)
    t4 = jnp.tile(shift + b * scale, 4)[None, :].astype(jnp.float32)

    xr = x_nhwc.reshape(N * H, W, Cin).astype(compute_dtype)

    csz = jnp.dtype(compute_dtype).itemsize
    osz = jnp.dtype(out_dtype).itemsize
    if vmem_budget is None:
        vmem_budget = _vmem_budget_bytes()
    if row_target is None:
        per_row = (2 * W * Cin * csz           # double-buffered input rows
                   + 2 * 4 * W * Cout * osz    # double-buffered output rows
                   + 4 * W * Cout * 4)         # f32 accumulator rows
        fixed = 2 * Cin * 4 * Cout * csz + (1 << 20)
        row_target = max(min((vmem_budget * 3 // 5 - fixed) // per_row, 512), 8)
    R = _pick_tile(N * H, row_target)

    out = pl.pallas_call(
        _upconv_kernel,
        out_shape=jax.ShapeDtypeStruct((N * H, 2, W, 2 * Cout), out_dtype),
        grid=(N * H // R,),
        in_specs=[
            pl.BlockSpec((R, W, Cin), lambda i: (i, 0, 0)),
            pl.BlockSpec((Cin, 4 * Cout), lambda i: (0, 0)),
            pl.BlockSpec((1, 4 * Cout), lambda i: (0, 0)),
            pl.BlockSpec((1, 4 * Cout), lambda i: (0, 0)),
        ],
        out_specs=pl.BlockSpec((R, 2, W, 2 * Cout), lambda i: (i, 0, 0, 0)),
        compiler_params=pltpu.CompilerParams(
            dimension_semantics=("parallel",),
            vmem_limit_bytes=int(vmem_budget)),
    )(xr, wk, s4, t4)

    # (N*H, 2, W, 2*Cout) row-major == (N, 2H, 2W, Cout): pure reshape.
    return out.reshape(N, 2 * H, 2 * W, Cout)


# ---------------------------------------------------------------------------
# Kernel B: Conv2d(k=3, s=1, p=1) + BN(eval) + ReLU over one or more input
# feature maps (their channel-concatenation is the conv input; the concat is
# fused away).  Grid = (batch, row tiles); every tile fetches a TH-row centre
# block plus 1-row halo blocks above/below (zeroed at the image border), so
# there is no whole-image scratch and both grid axes are parallel.
# ---------------------------------------------------------------------------
def _make_conv3_kernel(n_src, th):
    def kernel(*refs):
        c_refs = refs[0:n_src]
        hi_refs = refs[n_src:2 * n_src]
        lo_refs = refs[2 * n_src:3 * n_src]
        w_ref, sc_ref, sh_ref, o_ref = refs[3 * n_src:3 * n_src + 4]
        w_img = c_refs[0].shape[2]
        i = pl.program_id(1)
        last = pl.num_programs(1) - 1

        # Assemble the (th+2, W, Cin_total) row slab: halo rows (zeroed at the
        # image border) + centre rows; the per-source channel concat replaces
        # torch.cat((skip, up), dim=1) so each tap runs with K = Cin_total.
        slabs = []
        for c_r, hi_r, lo_r in zip(c_refs, hi_refs, lo_refs):
            top = jnp.where(i == 0, jnp.zeros_like(hi_r[0]), hi_r[0])
            bot = jnp.where(i == last, jnp.zeros_like(lo_r[0]), lo_r[0])
            slabs.append(jnp.concatenate([top, c_r[0], bot], axis=0))
        x0 = slabs[0] if n_src == 1 else jnp.concatenate(slabs, axis=-1)
        ct = x0.shape[-1]

        # The 3 kw-shifted operand slabs are built once per tile and reused
        # across the 3 kh taps (the kh shift is a free leading-dim slice); the
        # W-edge zero columns are handled here instead of a W-padded scratch.
        zcol = jnp.zeros((th + 2, 1, ct), x0.dtype)
        xm = jnp.concatenate([zcol, x0[:, :w_img - 1, :]], axis=1)   # col w-1
        xp = jnp.concatenate([x0[:, 1:, :], zcol], axis=1)           # col w+1

        cout = o_ref.shape[-1]
        acc = jnp.zeros((th * w_img, cout), jnp.float32)
        for kw, slab in ((0, xm), (1, x0), (2, xp)):
            for kh in range(3):
                lhs = slab[kh:kh + th].reshape(th * w_img, ct)
                acc = acc + jnp.dot(lhs, w_ref[kh, kw],
                                    preferred_element_type=jnp.float32)
        y = jnp.maximum(acc * sc_ref[0] + sh_ref[0], 0.0)    # fused BN + ReLU
        # TODO(synk): for Cout < 128 a lane-dense (TH, W*Cout) repack of this
        # store would avoid masked vst's, at the cost of a sublane->lane
        # relayout inside the kernel.
        o_ref[0] = y.astype(o_ref.dtype)

    return kernel


def conv3x3_bn_relu(xs, w, bias, scale, shift, *, compute_dtype, out_dtype,
                    row_target=None, vmem_budget=None):
    """xs: list of NHWC maps (same N,H,W) whose channel-concat is the conv
    input; w: (Cout, sum(Cin_s), 3, 3) [PyTorch Conv2d], in-channels ordered
    to match xs."""
    N, H, W, _ = xs[0].shape
    Cout, Ctot = w.shape[0], w.shape[1]
    assert sum(x.shape[-1] for x in xs) == Ctot

    xs_c = [x.astype(compute_dtype) for x in xs]
    w_t = jnp.transpose(w, (2, 3, 1, 0)).astype(compute_dtype)   # (3,3,Ctot,Cout)
    sc = scale.astype(jnp.float32)[None, :]
    sh = (shift + bias * scale).astype(jnp.float32)[None, :]     # fold conv bias

    csz = jnp.dtype(compute_dtype).itemsize
    osz = jnp.dtype(out_dtype).itemsize
    if vmem_budget is None:
        vmem_budget = _vmem_budget_bytes()
    if row_target is None:
        per_row = (2 * W * Ctot * csz          # double-buffered centre blocks
                   + 2 * W * Cout * osz        # double-buffered output block
                   + 3 * W * Ctot * csz        # x0 / xm / xp slab values
                   + W * Cout * 4)             # f32 accumulator
        fixed = 2 * 9 * Ctot * Cout * csz + 8 * W * Ctot * csz + (1 << 20)
        budget_rows = (vmem_budget * 3 // 5 - fixed) // per_row
        acc_rows = (192 * 1024) // max(W * Cout * 4, 1)          # bound the f32 acc
        row_target = max(min(budget_rows, acc_rows), 8)
    TH = _pick_tile(H, row_target, step=8)
    n_src = len(xs)

    center_specs = [
        pl.BlockSpec((1, TH, W, x.shape[-1]), lambda n, i: (n, i, 0, 0))
        for x in xs_c]
    top_specs = [
        pl.BlockSpec((1, 1, W, x.shape[-1]),
                     lambda n, i: (n, jnp.maximum(i * TH - 1, 0), 0, 0))
        for x in xs_c]
    bot_specs = [
        pl.BlockSpec((1, 1, W, x.shape[-1]),
                     lambda n, i: (n, jnp.minimum(i * TH + TH, H - 1), 0, 0))
        for x in xs_c]
    w_spec = pl.BlockSpec((3, 3, Ctot, Cout), lambda n, i: (0, 0, 0, 0))
    v_spec = pl.BlockSpec((1, Cout), lambda n, i: (0, 0))

    out = pl.pallas_call(
        _make_conv3_kernel(n_src, TH),
        out_shape=jax.ShapeDtypeStruct((N, H * W, Cout), out_dtype),
        grid=(N, H // TH),
        in_specs=center_specs + top_specs + bot_specs + [w_spec, v_spec, v_spec],
        out_specs=pl.BlockSpec((1, TH * W, Cout), lambda n, i: (n, i, 0)),
        compiler_params=pltpu.CompilerParams(
            dimension_semantics=("parallel", "parallel"),
            vmem_limit_bytes=int(vmem_budget)),
    )(*xs_c, *xs_c, *xs_c, w_t, sc, sh)

    return out.reshape(N, H, W, Cout)


# ---------------------------------------------------------------------------
# Module glue
# ---------------------------------------------------------------------------
def unet_up_forward(params, x, skip, *, compute_dtype=jnp.bfloat16,
                    up_rows=None, conv_rows=None, data_format="NCHW"):
    # TODO(synk): the NCHW<->NHWC transposes and the kernel-A -> conv-#1 HBM
    # round trip could be removed by keeping the model NHWC end-to-end and
    # fusing kernel A into conv #1's input pipeline.
    if data_format == "NCHW":
        x = jnp.transpose(x, (0, 2, 3, 1))
        skip = jnp.transpose(skip, (0, 2, 3, 1))
    out_dtype = x.dtype
    budget = _vmem_budget_bytes()

    s0, t0 = _bn_fold(*params["bn0"])
    up = upconv2x2_bn_relu(x, params["wt"], params["bt"], s0, t0,
                           compute_dtype=compute_dtype, out_dtype=compute_dtype,
                           row_target=up_rows, vmem_budget=budget)

    # torch.cat((skip, up), dim=1) fused into conv #1 (channel concat happens
    # on the in-VMEM row slab; K = 2*Cout per matmul).
    s1, t1 = _bn_fold(*params["bn1"])
    h = conv3x3_bn_relu([skip, up], params["w1"], params["b1"], s1, t1,
                        compute_dtype=compute_dtype, out_dtype=compute_dtype,
                        row_target=conv_rows, vmem_budget=budget)

    s2, t2 = _bn_fold(*params["bn2"])
    h = conv3x3_bn_relu([h], params["w2"], params["b2"], s2, t2,
                        compute_dtype=compute_dtype, out_dtype=out_dtype,
                        row_target=conv_rows, vmem_budget=budget)

    if data_format == "NCHW":
        h = jnp.transpose(h, (0, 3, 1, 2))
    return h


def init_params(key, in_channel, out_channel):
    ks = jax.random.split(key, 9)

    def nrm(k, shape, scl=0.1):
        return (scl * jax.random.normal(k, shape)).astype(jnp.float32)

    def bn(k):
        k1, k2, k3, k4 = jax.random.split(k, 4)
        gamma = 1.0 + nrm(k1, (out_channel,))
        beta = nrm(k2, (out_channel,))
        rmean = nrm(k3, (out_channel,))
        rvar = 0.5 + jnp.abs(nrm(k4, (out_channel,)))
        return (gamma, beta, rmean, rvar)

    return dict(
        wt=nrm(ks[0], (in_channel, out_channel, 2, 2)),       # ConvTranspose2d
        bt=nrm(ks[1], (out_channel,)),
        w1=nrm(ks[2], (out_channel, 2 * out_channel, 3, 3)),  # Conv2d #1
        b1=nrm(ks[3], (out_channel,)),
        w2=nrm(ks[4], (out_channel, out_channel, 3, 3)),      # Conv2d #2
        b2=nrm(ks[5], (out_channel,)),
        bn0=bn(ks[6]), bn1=bn(ks[7]), bn2=bn(ks[8]),
    )


def _reference_forward(params, x_nchw, skip_nchw, compute_dtype=jnp.float32):
    """Pure-JAX/XLA reference.  With compute_dtype=bfloat16 it applies the same
    operand casts as the kernels (f32 accumulation + f32 epilogue), giving a
    tight structural check; with float32 it is the full-precision reference."""
    cd = compute_dtype
    hi = jax.lax.Precision.HIGHEST
    x = jnp.transpose(x_nchw, (0, 2, 3, 1)).astype(cd)
    skip = jnp.transpose(skip_nchw, (0, 2, 3, 1)).astype(cd)
    N, H, W, _ = x.shape
    cout = params["wt"].shape[1]

    s0, t0 = _bn_fold(*params["bn0"])
    up = jnp.einsum("nhwi,iokl->nhkwlo", x, params["wt"].astype(cd),
                    precision=hi, preferred_element_type=jnp.float32)
    up = up.reshape(N, 2 * H, 2 * W, cout) + params["bt"]
    up = jnp.maximum(up * s0 + t0, 0.0).astype(cd)

    def conv3(z, wgt, b, s, t, odt):
        y = jax.lax.conv_general_dilated(
            z, jnp.transpose(wgt, (2, 3, 1, 0)).astype(cd), (1, 1), "SAME",
            dimension_numbers=("NHWC", "HWIO", "NHWC"), precision=hi,
            preferred_element_type=jnp.float32)
        return jnp.maximum((y + b) * s + t, 0.0).astype(odt)

    cat = jnp.concatenate([skip, up], axis=-1)
    s1, t1 = _bn_fold(*params["bn1"])
    h = conv3(cat, params["w1"], params["b1"], s1, t1, cd)
    s2, t2 = _bn_fold(*params["bn2"])
    h = conv3(h, params["w2"], params["b2"], s2, t2, jnp.float32)
    return jnp.transpose(h, (0, 3, 1, 2))


if __name__ == "__main__":
    N, IN_CH, OUT_CH, H, W = 2, 128, 64, 16, 16   # skip spatial = 2H x 2W

    key = jax.random.PRNGKey(0)
    kp, kx, ks = jax.random.split(key, 3)
    params = init_params(kp, IN_CH, OUT_CH)

    x = jax.random.normal(kx, (N, IN_CH, H, W), dtype=jnp.float32)        # NCHW
    skip = jax.random.normal(ks, (N, OUT_CH, 2 * H, 2 * W), jnp.float32)  # NCHW

    # Small row tiles so the demo exercises the multi-step pipelined grids
    # (including interior row tiles whose halos come from neighbouring tiles).
    out = unet_up_forward(params, x, skip, up_rows=8, conv_rows=8)
    out = jax.block_until_ready(out)

    assert out.shape == (N, OUT_CH, 2 * H, 2 * W), out.shape
    assert out.dtype == jnp.float32
    assert bool(jnp.all(jnp.isfinite(out)))

    # Tight structural check: reference with identical bf16 operand casts
    # (f32 accumulation + f32 epilogue).
    ref_bf16 = _reference_forward(params, x, skip, compute_dtype=jnp.bfloat16)
    assert bool(jnp.allclose(out, ref_bf16, rtol=5e-2, atol=5e-2)), (
        float(jnp.max(jnp.abs(out - ref_bf16))))

    # Loose sanity check against the full-f32 reference (bf16 operand noise).
    ref_f32 = _reference_forward(params, x, skip, compute_dtype=jnp.float32)
    assert bool(jnp.allclose(out, ref_f32, rtol=2.5e-1, atol=2.5e-1)), (
        float(jnp.max(jnp.abs(out - ref_f32))))

    print("KERNEL_OK")
</pallas_src>

<mosaic_0001>
module attributes {stable_mosaic.version = 11 : i64} {
  func.func @_upconv_kernel(%arg0: i32, %arg1: memref<8x16x128xbf16, #tpu.memory_space<vmem>>, %arg2: memref<128x256xbf16, #tpu.memory_space<vmem>>, %arg3: memref<1x256xf32, #tpu.memory_space<vmem>>, %arg4: memref<1x256xf32, #tpu.memory_space<vmem>>, %arg5: memref<8x2x16x128xbf16, #tpu.memory_space<vmem>>) attributes {dimension_semantics = [#tpu.dimension_semantics<parallel>], iteration_bounds = array<i64: 4>, scalar_prefetch = 0 : i64, scratch_operands = 0 : i64, tpu.core_type = #tpu.core_type<tc>, window_params = [{transform_indices = @transform_0, window_bounds = array<i64: 8, 16, 128>}, {pipeline_mode = #tpu.pipeline_mode<synchronous>, transform_indices = @transform_1, window_bounds = array<i64: 128, 256>}, {pipeline_mode = #tpu.pipeline_mode<synchronous>, transform_indices = @transform_2, window_bounds = array<i64: 1, 256>}, {pipeline_mode = #tpu.pipeline_mode<synchronous>, transform_indices = @transform_3, window_bounds = array<i64: 1, 256>}, {transform_indices = @transform_4, window_bounds = array<i64: 8, 2, 16, 128>}]} {
    %c0 = arith.constant 0 : index
    %c0_0 = arith.constant 0 : index
    %c0_1 = arith.constant 0 : index
    %0 = vector.load %arg1[%c0, %c0_0, %c0_1] : memref<8x16x128xbf16, #tpu.memory_space<vmem>>, vector<8x16x128xbf16>
    %1 = vector.shape_cast %0 : vector<8x16x128xbf16> to vector<128x128xbf16>
    %c0_2 = arith.constant 0 : index
    %c0_3 = arith.constant 0 : index
    %2 = vector.load %arg2[%c0_2, %c0_3] : memref<128x256xbf16, #tpu.memory_space<vmem>>, vector<128x256xbf16>
    %cst = arith.constant dense<0.000000e+00> : vector<128x256xf32>
    %3 = tpu.matmul %1, %2, %cst {dimension_numbers = #tpu.dot_dimension_numbers<[1], [0], [0], [1], [0, 0, 1, 1], [], []>} : vector<128x128xbf16>, vector<128x256xbf16>, vector<128x256xf32> -> vector<128x256xf32>
    %c0_4 = arith.constant 0 : index
    %c0_5 = arith.constant 0 : index
    %4 = vector.load %arg3[%c0_4, %c0_5] : memref<1x256xf32, #tpu.memory_space<vmem>>, vector<1x256xf32>
    %5 = vector.shape_cast %4 : vector<1x256xf32> to vector<256xf32>
    %6 = vector.shape_cast %5 : vector<256xf32> to vector<1x256xf32>
    %7 = vector.broadcast %6 : vector<1x256xf32> to vector<128x256xf32>
    %8 = arith.mulf %3, %7 : vector<128x256xf32>
    %c0_6 = arith.constant 0 : index
    %c0_7 = arith.constant 0 : index
    %9 = vector.load %arg4[%c0_6, %c0_7] : memref<1x256xf32, #tpu.memory_space<vmem>>, vector<1x256xf32>
    %10 = vector.shape_cast %9 : vector<1x256xf32> to vector<256xf32>
    %11 = vector.shape_cast %10 : vector<256xf32> to vector<1x256xf32>
    %12 = vector.broadcast %11 : vector<1x256xf32> to vector<128x256xf32>
    %13 = arith.addf %8, %12 : vector<128x256xf32>
    %cst_8 = arith.constant 0.000000e+00 : f32
    %14 = vector.broadcast %cst_8 : f32 to vector<128x256xf32>
    %15 = arith.maximumf %13, %14 : vector<128x256xf32>
    %16 = vector.shape_cast %15 : vector<128x256xf32> to vector<8x16x256xf32>
    %17 = vector.extract_strided_slice %16 {offsets = [0, 0, 0], sizes = [8, 16, 128], strides = [1, 1, 1]} : vector<8x16x256xf32> to vector<8x16x128xf32>
    %18 = arith.truncf %17 : vector<8x16x128xf32> to vector<8x16x128xbf16>
    %c0_9 = arith.constant 0 : index
    %c0_10 = arith.constant 0 : index
    %c0_11 = arith.constant 0 : index
    %c0_12 = arith.constant 0 : index
    %19 = vector.load %arg5[%c0_9, %c0_10, %c0_11, %c0_12] : memref<8x2x16x128xbf16, #tpu.memory_space<vmem>>, vector<8x1x16x128xbf16>
    %20 = vector.shape_cast %19 : vector<8x1x16x128xbf16> to vector<8x16x128xbf16>
    %21 = vector.shape_cast %18 : vector<8x16x128xbf16> to vector<8x1x16x128xbf16>
    tpu.vector_store %arg5[%c0_9, %c0_10, %c0_11, %c0_12], %21 {strides = array<i32>} : memref<8x2x16x128xbf16, #tpu.memory_space<vmem>>, vector<8x1x16x128xbf16>,
    %22 = vector.extract_strided_slice %16 {offsets = [0, 0, 128], sizes = [8, 16, 128], strides = [1, 1, 1]} : vector<8x16x256xf32> to vector<8x16x128xf32>
    %23 = arith.truncf %22 : vector<8x16x128xf32> to vector<8x16x128xbf16>
    %c0_13 = arith.constant 0 : index
    %c1 = arith.constant 1 : index
    %c0_14 = arith.constant 0 : index
    %c0_15 = arith.constant 0 : index
    %24 = vector.load %arg5[%c0_13, %c1, %c0_14, %c0_15] : memref<8x2x16x128xbf16, #tpu.memory_space<vmem>>, vector<8x1x16x128xbf16>
    %25 = vector.shape_cast %24 : vector<8x1x16x128xbf16> to vector<8x16x128xbf16>
    %26 = vector.shape_cast %23 : vector<8x16x128xbf16> to vector<8x1x16x128xbf16>
    tpu.vector_store %arg5[%c0_13, %c1, %c0_14, %c0_15], %26 {strides = array<i32>} : memref<8x2x16x128xbf16, #tpu.memory_space<vmem>>, vector<8x1x16x128xbf16>,
    return
  }
  func.func @transform_0(%arg0: i32) -> (i32, i32, i32) {
    %c0_i32 = arith.constant 0 : i32
    %c0_i32_0 = arith.constant 0 : i32
    %c0_i32_1 = arith.constant 0 : i32
    return %arg0, %c0_i32, %c0_i32_0 : i32, i32, i32
  }
  func.func @transform_1(%arg0: i32) -> (i32, i32) {
    %c0_i32 = arith.constant 0 : i32
    %c0_i32_0 = arith.constant 0 : i32
    %c0_i32_1 = arith.constant 0 : i32
    return %c0_i32, %c0_i32_0 : i32, i32
  }
  func.func @transform_2(%arg0: i32) -> (i32, i32) {
    %c0_i32 = arith.constant 0 : i32
    %c0_i32_0 = arith.constant 0 : i32
    %c0_i32_1 = arith.constant 0 : i32
    return %c0_i32, %c0_i32_0 : i32, i32
  }
  func.func @transform_3(%arg0: i32) -> (i32, i32) {
    %c0_i32 = arith.constant 0 : i32
    %c0_i32_0 = arith.constant 0 : i32
    %c0_i32_1 = arith.constant 0 : i32
    return %c0_i32, %c0_i32_0 : i32, i32
  }
  func.func @transform_4(%arg0: i32) -> (i32, i32, i32, i32) {
    %c0_i32 = arith.constant 0 : i32
    %c0_i32_0 = arith.constant 0 : i32
    %c0_i32_1 = arith.constant 0 : i32
    %c0_i32_2 = arith.constant 0 : i32
    return %arg0, %c0_i32, %c0_i32_0, %c0_i32_1 : i32, i32, i32, i32
  }
}

</mosaic_0001>

<llo_original>
// kernel: tpu_custom_call.1
$region0: #{tpu_custom_call.1}
  #allocation0 [shape = 'u32[]', space=smem, size = 0x4, offset = 0x4, fixed_abs, tag = 'smem constant byte address 0x4 - core index']
  #allocation1 [shape = 'u32[72,128]{1,0:T(1,128)}', space=vmem, size = 0x9000, scoped, tag = 'internal scratch']
  %s0 = inlined_call_operand.hbm [shape: bf16[32,16,128], index: 0, kind: input, shape index: {}]
  %s1 = inlined_call_operand.hbm [shape: bf16[128,256], index: 1, kind: input, shape index: {}]
  %s2 = inlined_call_operand.hbm [shape: f32[1,256], index: 2, kind: input, shape index: {}]
  %s3 = inlined_call_operand.vmem [shape: f32[1,256], index: 3, kind: input, shape index: {}]
  %s4 = inlined_call_operand.hbm [shape: bf16[32,2,16,128], index: 4, kind: output, shape index: {}]
  %s5 = sld [smem:[#allocation0]]
  $region61: #{tpu_custom_call.1} parent=0
    _
  %s7 = ssub.s32 1, %s5
  %s8 = scalar_select 0, %s7, %s5
  $region1: #{tpu_custom_call.1} parent=0
    #allocation2 [shape = 'u8[65536]{0}', space=vmem, size = 0x10000, scoped, tag = 'input window, operand 0']
    #allocation3 [shape = 's32[2]{0}', space=sflag, size = 0x8, scoped, tag = 'scoped memory for tpu_custom_call.1']
    #allocation4 [shape = 's32[2]{0}', space=sflag, size = 0x8, scoped, tag = 'scoped memory for tpu_custom_call.1']
    #allocation5 [shape = 'u8[65536]{0}', space=vmem, size = 0x10000, scoped, tag = 'input window, operand 1, single buffered']
    #allocation6 [shape = 's32[1]{0}', space=sflag, size = 0x4, scoped, tag = 'scoped memory for tpu_custom_call.1']
    #allocation7 [shape = 'u8[1024]{0}', space=vmem, size = 0x400, scoped, tag = 'input window, operand 2, single buffered']
    #allocation8 [shape = 'u8[131072]{0}', space=vmem, size = 0x20000, scoped, tag = 'output window, operand 0']
    %9 = vsyncpa [#allocation3], 0
    %s10 = scalar_lea.sflag [#allocation3], 1
    %11 = vsyncpa %s10, 0
    %12 = vsyncpa [#allocation6], 0
    %13 = vsyncpa [#allocation4], 0
    %s14 = scalar_lea.sflag [#allocation4], 1
    %15 = vsyncpa %s14, 0
    loop: start=0, step=1, limit=6
    $region2: #{tpu_custom_call.1} parent=1 // loop_pre_header
      _
    $region3: #{tpu_custom_call.1} parent=1 // loop_header
      %s17 = sphi 0, %s21
      %p18 = scmp.ge.s32.totalorder %s17, 6
      %s27 = sphi 0, %s29
      %s30 = sphi 0, %s27
      %s31 = sphi 0, %s30
      %s47 = sphi 0, %s31
      %s51 = sphi 0, %s51
      %s53 = sphi 0, %s51
      %s54 = sphi 0, %s53
      %s68 = sphi 0, %s54
      %s72 = sphi 0, %s72
      %s74 = sphi 0, %s72
      %s75 = sphi 0, %s74
      %s89 = sphi 0, %s75
      %s93 = sphi 0, %s93
      %s95 = sphi 0, %s93
      %s96 = sphi 0, %s95
      %s110 = sphi 0, %s96
      %s116 = sphi 0, %s118
      %s119 = sphi 0, %s116
      %s120 = sphi 0, %s119
      %s136 = sphi 0, %s120
    $region4: #{tpu_custom_call.1} parent=1 // loop_header_branch
      %20 = sbr.rel (%p18) target = $region8
    $region5: #{tpu_custom_call.1} parent=1 // loop_body
      %s22 = ssub.s32 %s17, 1
      %s23 = ssub.s32 %s17, 2
      %s24 = sadd.s32 %s17, 1
      %s25 = ssub.s32 %s17, %s24
      %p26 = scmp.eq.s32.totalorder %s25, 0
      %s28 = sadd.s32 %s27, 1
      %s29 = scalar_select %p26, %s27, %s28
      %p32 = pneg %p26
      %p33 = scmp.eq.s32.totalorder %s17, 3
      %p34 = por %p32, %p33
      %p35 = scmp.ne.s32.totalorder %s27, %s30
      %p36 = scmp.eq.s32.totalorder %s17, 0
      %p37 = por %p35, %p36
      %p38 = scmp.ne.s32.totalorder %s27, %s30
      %p39 = scmp.eq.s32.totalorder %s22, 3
      %p40 = por %p38, %p39
      %p41 = scmp.ne.s32.totalorder %s30, %s31
      %p42 = scmp.eq.s32.totalorder %s22, 0
      %p43 = por %p41, %p42
      %p44 = scmp.ne.s32.totalorder %s30, %s31
      %p45 = scmp.eq.s32.totalorder %s23, 3
      %p46 = por %p44, %p45
      %p48 = scmp.ne.s32.totalorder %s31, %s47
      %p49 = scmp.eq.s32.totalorder %s23, 0
      %p50 = por %p48, %p49
      %s52 = sadd.s32 %s51, 1
      %p55 = scmp.eq.s32.totalorder %s17, 3
      %p56 = scmp.ne.s32.totalorder %s51, %s53
      %p57 = scmp.eq.s32.totalorder %s17, 0
      %p58 = por %p56, %p57
      %p59 = scmp.ne.s32.totalorder %s51, %s53
      %p60 = scmp.eq.s32.totalorder %s22, 3
      %p61 = por %p59, %p60
      %p62 = scmp.ne.s32.totalorder %s53, %s54
      %p63 = scmp.eq.s32.totalorder %s22, 0
      %p64 = por %p62, %p63
      %p65 = scmp.ne.s32.totalorder %s53, %s54
      %p66 = scmp.eq.s32.totalorder %s23, 3
      %p67 = por %p65, %p66
      %p69 = scmp.ne.s32.totalorder %s54, %s68
      %p70 = scmp.eq.s32.totalorder %s23, 0
      %p71 = por %p69, %p70
      %s73 = sadd.s32 %s72, 1
      %p76 = scmp.eq.s32.totalorder %s17, 3
      %p77 = scmp.ne.s32.totalorder %s72, %s74
      %p78 = scmp.eq.s32.totalorder %s17, 0
      %p79 = por %p77, %p78
      %p80 = scmp.ne.s32.totalorder %s72, %s74
      %p81 = scmp.eq.s32.totalorder %s22, 3
      %p82 = por %p80, %p81
      %p83 = scmp.ne.s32.totalorder %s74, %s75
      %p84 = scmp.eq.s32.totalorder %s22, 0
      %p85 = por %p83, %p84
      %p86 = scmp.ne.s32.totalorder %s74, %s75
      %p87 = scmp.eq.s32.totalorder %s23, 3
      %p88 = por %p86, %p87
      %p90 = scmp.ne.s32.totalorder %s75, %s89
      %p91 = scmp.eq.s32.totalorder %s23, 0
      %p92 = por %p90, %p91
      %s94 = sadd.s32 %s93, 1
      %p97 = scmp.eq.s32.totalorder %s17, 3
      %p98 = scmp.ne.s32.totalorder %s93, %s95
      %p99 = scmp.eq.s32.totalorder %s17, 0
      %p100 = por %p98, %p99
      %p101 = scmp.ne.s32.totalorder %s93, %s95
      %p102 = scmp.eq.s32.totalorder %s22, 3
      %p103 = por %p101, %p102
      %p104 = scmp.ne.s32.totalorder %s95, %s96
      %p105 = scmp.eq.s32.totalorder %s22, 0
      %p106 = por %p104, %p105
      %p107 = scmp.ne.s32.totalorder %s95, %s96
      %p108 = scmp.eq.s32.totalorder %s23, 3
      %p109 = por %p107, %p108
      %p111 = scmp.ne.s32.totalorder %s96, %s110
      %p112 = scmp.eq.s32.totalorder %s23, 0
      %p113 = por %p111, %p112
      %s114 = ssub.s32 %s17, %s24
      %p115 = scmp.eq.s32.totalorder %s114, 0
      %s117 = sadd.s32 %s116, 1
      %s118 = scalar_select %p115, %s116, %s117
      %p121 = pneg %p115
      %p122 = scmp.eq.s32.totalorder %s17, 3
      %p123 = por %p121, %p122
      %p124 = scmp.ne.s32.totalorder %s116, %s119
      %p125 = scmp.eq.s32.totalorder %s17, 0
      %p126 = por %p124, %p125
      %p127 = scmp.ne.s32.totalorder %s116, %s119
      %p128 = scmp.eq.s32.totalorder %s22, 3
      %p129 = por %p127, %p128
      %p130 = scmp.ne.s32.totalorder %s119, %s120
      %p131 = scmp.eq.s32.totalorder %s22, 0
      %p132 = por %p130, %p131
      %p133 = scmp.ne.s32.totalorder %s119, %s120
      %p134 = scmp.eq.s32.totalorder %s23, 3
      %p135 = por %p133, %p134
      %p137 = scmp.ne.s32.totalorder %s120, %s136
      %p138 = scmp.eq.s32.totalorder %s23, 0
      %p139 = por %p137, %p138
      %p140 = scmp.le.s32.totalorder 1, %s17
      %p141 = scmp.lt.s32.totalorder %s17, 5
      %p142 = pnand %p140, %p141
      %p143 = pneg %p142
      // Predicated region
      $region9: #{tpu_custom_call.1} parent=5 // pred_check
        _
      $region10: #{tpu_custom_call.1} parent=5 // pred_check_branch
        %145 = sbr.rel (%p142) target = $region12
      $region11: #{tpu_custom_call.1} parent=5 // pred_region
        %s146 = ssub.s32 %s17, 1
        // Predicated region
        $region13: #{tpu_custom_call.1} parent=11 // pred_check
          %p147 = pneg %p64
        $region14: #{tpu_custom_call.1} parent=11 // pred_check_branch
          %149 = sbr.rel (%p147) target = $region16
        $region15: #{tpu_custom_call.1} parent=11 // pred_region
          %151 = vsyncadd [#allocation6], 0
          %s152 = sshll.u32 %s1, 4
          %s153 = int_to_ptr.hbm [resolvable:$true] %s152
          %s154 = sshll.u32 [#allocation5], 4
          %s155 = int_to_ptr.vmem [resolvable:$true] %s154
          %160 = dma.hbm_to_vmem [thread:$0]  %s153, 2048, %s155, [#allocation6], 128, 128, 8
        $region16: #{tpu_custom_call.1} parent=11 // pred_fallthru
          _
        // Predicated region
        $region17: #{tpu_custom_call.1} parent=11 // pred_check
          %p161 = pneg %p85
        $region18: #{tpu_custom_call.1} parent=11 // pred_check_branch
          %163 = sbr.rel (%p161) target = $region20
        $region19: #{tpu_custom_call.1} parent=11 // pred_region
          %165 = vsyncadd [#allocation6], 0
          %s167 = sshll.u32 %s2, 4
          %s168 = int_to_ptr.hbm [resolvable:$true] %s167
          %s169 = sshll.u32 [#allocation7], 4
          %s170 = int_to_ptr.vmem [resolvable:$true] %s169
          %172 = dma.hbm_to_vmem [thread:$0]  %s168, 32, %s170, [#allocation6]
        $region20: #{tpu_custom_call.1} parent=11 // pred_fallthru
          _
        // Predicated region
        $region21: #{tpu_custom_call.1} parent=11 // pred_check
          %p173 = pneg %p106
        $region22: #{tpu_custom_call.1} parent=11 // pred_check_branch
          %175 = sbr.rel (%p173) target = $region24
        $region23: #{tpu_custom_call.1} parent=11 // pred_region
          _
        $region24: #{tpu_custom_call.1} parent=11 // pred_fallthru
          _
      $region12: #{tpu_custom_call.1} parent=5 // pred_fallthru
        _
      %p176 = scmp.lt.s32.totalorder %s17, 4
      // Predicated region
      $region25: #{tpu_custom_call.1} parent=5 // pred_check
        %p177 = pneg %p176
      $region26: #{tpu_custom_call.1} parent=5 // pred_check_branch
        %179 = sbr.rel (%p177) target = $region28
      $region27: #{tpu_custom_call.1} parent=5 // pred_region
        // Predicated region
        $region29: #{tpu_custom_call.1} parent=27 // pred_check
          %p180 = pneg %p37
        $region30: #{tpu_custom_call.1} parent=27 // pred_check_branch
          %182 = sbr.rel (%p180) target = $region32
        $region31: #{tpu_custom_call.1} parent=27 // pred_region
          %s183 = sand.u32 %s27, 1
          %s184 = scalar_lea.sflag [#allocation3], %s183
          %s185 = sand.u32 %s27, 1
          %s186 = smul.addr %s185, 64
          %s187 = scalar_lea.vmem [#allocation2], %s186
          %s188 = smul.u32 8, %s17
          %190 = vsyncadd %s184, 0
          %s191 = smul.addr %s188, 2
          %s192 = smul.addr %s191, 4
          %s193 = scalar_lea.hbm %s0, %s192
          %s194 = sshll.u32 %s193, 4
          %s195 = int_to_ptr.hbm [resolvable:$true] %s194
          %s196 = sshll.u32 %s187, 4
          %s197 = int_to_ptr.vmem [resolvable:$true] %s196
          %202 = dma.hbm_to_vmem [thread:$0]  %s195, 1024, %s197, %s184, 64, 64, 4
        $region32: #{tpu_custom_call.1} parent=27 // pred_fallthru
          _
      $region28: #{tpu_custom_call.1} parent=5 // pred_fallthru
        _
      %p203 = scmp.le.s32.totalorder 1, %s17
      %p204 = scmp.lt.s32.totalorder %s17, 5
      %p205 = pnand %p203, %p204
      %p206 = pneg %p205
      // Predicated region
      $region33: #{tpu_custom_call.1} parent=5 // pred_check
        _
      $region34: #{tpu_custom_call.1} parent=5 // pred_check_branch
        %208 = sbr.rel (%p205) target = $region36
      $region35: #{tpu_custom_call.1} parent=5 // pred_region
        %s209 = ssub.s32 %s17, 1
        %s210 = sand.u32 %s30, 1
        %s211 = scalar_lea.sflag [#allocation3], %s210
        %s212 = sand.u32 %s30, 1
        %s213 = smul.addr %s212, 64
        %s214 = scalar_lea.vmem [#allocation2], %s213
        // Predicated region
        $region37: #{tpu_custom_call.1} parent=35 // pred_check
          %p215 = pneg %p43
        $region38: #{tpu_custom_call.1} parent=35 // pred_check_branch
          %217 = sbr.rel (%p215) target = $region40
        $region39: #{tpu_custom_call.1} parent=35 // pred_region
          %219 = dma.done %s211, 1024
        $region40: #{tpu_custom_call.1} parent=35 // pred_fallthru
          _
        // Predicated region
        $region41: #{tpu_custom_call.1} parent=35 // pred_check
          %p220 = pneg %p64
        $region42: #{tpu_custom_call.1} parent=35 // pred_check_branch
          %222 = sbr.rel (%p220) target = $region44
        $region43: #{tpu_custom_call.1} parent=35 // pred_region
          %224 = dma.done [#allocation6], 2048
        $region44: #{tpu_custom_call.1} parent=35 // pred_fallthru
          _
        // Predicated region
        $region45: #{tpu_custom_call.1} parent=35 // pred_check
          %p225 = pneg %p85
        $region46: #{tpu_custom_call.1} parent=35 // pred_check_branch
          %227 = sbr.rel (%p225) target = $region48
        $region47: #{tpu_custom_call.1} parent=35 // pred_region
          %229 = dma.done [#allocation6], 32
        $region48: #{tpu_custom_call.1} parent=35 // pred_fallthru
          _
        %s230 = sand.u32 %s30, 1
        %s231 = scalar_lea.sflag [#allocation3], %s230
        %s232 = sand.u32 %s30, 1
        %s233 = smul.addr %s232, 64
        %s234 = scalar_lea.vmem [#allocation2], %s233
        %p235 = pneg %p43
        %p236 = pneg %p40
        %p237 = pneg %p64
        %p238 = pneg %p61
        %p239 = pneg %p85
        %p240 = pneg %p82
        %p241 = pneg %p106
        %p242 = pneg %p103
        %p243 = pneg %p132
        %p244 = pneg %p129
        %s245 = sand.u32 %s119, 1
        %s246 = scalar_lea.sflag [#allocation4], %s245
        %s247 = sand.u32 %s119, 1
        %s248 = smul.addr %s247, 128
        %s249 = scalar_lea.vmem [#allocation8], %s248
        %s250 = smul.u32 8, %s22
        %s251 = smul.u32 8, %s22
        %v252 = vld [vmem:[%s214] sm:$0xf]
        %v253 = vld [vmem:[%s214 + $0x4] sm:$0xf]
        %v254 = vld [vmem:[%s214 + $0x8] sm:$0xf]
        %v255 = vld [vmem:[%s214 + $0xc] sm:$0xf]
        %v256 = vld [vmem:[%s214 + $0x10] sm:$0xf]
        %v257 = vld [vmem:[%s214 + $0x14] sm:$0xf]
        %v258 = vld [vmem:[%s214 + $0x18] sm:$0xf]
        %v259 = vld [vmem:[%s214 + $0x1c] sm:$0xf]
        %v260 = vld [vmem:[%s214 + $0x20] sm:$0xf]
        %v261 = vld [vmem:[%s214 + $0x24] sm:$0xf]
        %v262 = vld [vmem:[%s214 + $0x28] sm:$0xf]
        %v263 = vld [vmem:[%s214 + $0x2c] sm:$0xf]
        %v264 = vld [vmem:[%s214 + $0x30] sm:$0xf]
        %v265 = vld [vmem:[%s214 + $0x34] sm:$0xf]
        %v266 = vld [vmem:[%s214 + $0x38] sm:$0xf]
        %v267 = vld [vmem:[%s214 + $0x3c] sm:$0xf]
        %v268 = vld [vmem:[#allocation5] sm:$0xff]
        %v269 = vld [vmem:[#allocation5 + $0x8] sm:$0xff]
        %v270 = vld [vmem:[#allocation5 + $0x10] sm:$0xff]
        %v271 = vld [vmem:[#allocation5 + $0x18] sm:$0xff]
        %v272 = vld [vmem:[#allocation5 + $0x20] sm:$0xff]
        %v273 = vld [vmem:[#allocation5 + $0x28] sm:$0xff]
        %v274 = vld [vmem:[#allocation5 + $0x30] sm:$0xff]
        %v275 = vld [vmem:[#allocation5 + $0x38] sm:$0xff]
        %v276 = vld [vmem:[#allocation5 + $0x40] sm:$0xff]
        %v277 = vld [vmem:[#allocation5 + $0x48] sm:$0xff]
        %v278 = vld [vmem:[#allocation5 + $0x50] sm:$0xff]
        %v279 = vld [vmem:[#allocation5 + $0x58] sm:$0xff]
        %v280 = vld [vmem:[#allocation5 + $0x60] sm:$0xff]
        %v281 = vld [vmem:[#allocation5 + $0x68] sm:$0xff]
        %v282 = vld [vmem:[#allocation5 + $0x70] sm:$0xff]
        %v283 = vld [vmem:[#allocation5 + $0x78] sm:$0xff]
        %v300 = vunpack.c.l.b16 %v252
        %v301 = vunpack.c.l.b16 %v253
        %v302 = vunpack.c.l.b16 %v254
        %v303 = vunpack.c.l.b16 %v255
        %v304 = vunpack.c.l.b16 %v256
        %v305 = vunpack.c.l.b16 %v257
        %v306 = vunpack.c.l.b16 %v258
        %v307 = vunpack.c.l.b16 %v259
        %v308 = vunpack.c.l.b16 %v260
        %v309 = vunpack.c.l.b16 %v261
        %v310 = vunpack.c.l.b16 %v262
        %v311 = vunpack.c.l.b16 %v263
        %v312 = vunpack.c.l.b16 %v264
        %v313 = vunpack.c.l.b16 %v265
        %v314 = vunpack.c.l.b16 %v266
        %v315 = vunpack.c.l.b16 %v267
        %v316 = vpack.c.b16 %v301, %v300
        %v317 = vpack.c.b16 %v303, %v302
        %v318 = vpack.c.b16 %v305, %v304
        %v319 = vpack.c.b16 %v307, %v306
        %v320 = vpack.c.b16 %v309, %v308
        %v321 = vpack.c.b16 %v311, %v310
        %v322 = vpack.c.b16 %v313, %v312
        %v323 = vpack.c.b16 %v315, %v314
        %v348 = vunpack.c.l.b16 %v268
        %v349 = vunpack.c.h.b16 %v268
        %v350 = vunpack.c.l.b16 %v269
        %v351 = vunpack.c.h.b16 %v269
        %v352 = vunpack.c.l.b16 %v270
        %v353 = vunpack.c.h.b16 %v270
        %v354 = vunpack.c.l.b16 %v271
        %v355 = vunpack.c.h.b16 %v271
        %v356 = vunpack.c.l.b16 %v272
        %v357 = vunpack.c.h.b16 %v272
        %v358 = vunpack.c.l.b16 %v273
        %v359 = vunpack.c.h.b16 %v273
        %v360 = vunpack.c.l.b16 %v274
        %v361 = vunpack.c.h.b16 %v274
        %v362 = vunpack.c.l.b16 %v275
        %v363 = vunpack.c.h.b16 %v275
        %v364 = vunpack.c.l.b16 %v276
        %v365 = vunpack.c.h.b16 %v276
        %v366 = vunpack.c.l.b16 %v277
        %v367 = vunpack.c.h.b16 %v277
        %v368 = vunpack.c.l.b16 %v278
        %v369 = vunpack.c.h.b16 %v278
        %v370 = vunpack.c.l.b16 %v279
        %v371 = vunpack.c.h.b16 %v279
        %v372 = vunpack.c.l.b16 %v280
        %v373 = vunpack.c.h.b16 %v280
        %v374 = vunpack.c.l.b16 %v281
        %v375 = vunpack.c.h.b16 %v281
        %v376 = vunpack.c.l.b16 %v282
        %v377 = vunpack.c.h.b16 %v282
        %v378 = vunpack.c.l.b16 %v283
        %v379 = vunpack.c.h.b16 %v283
        %v380 = vpack.c.b16 %v350, %v348
        %v381 = vpack.c.b16 %v351, %v349
        %v382 = vpack.c.b16 %v354, %v352
        %v383 = vpack.c.b16 %v355, %v353
        %v384 = vpack.c.b16 %v358, %v356
        %v385 = vpack.c.b16 %v359, %v357
        %v386 = vpack.c.b16 %v362, %v360
        %v387 = vpack.c.b16 %v363, %v361
        %v388 = vpack.c.b16 %v366, %v364
        %v389 = vpack.c.b16 %v367, %v365
        %v390 = vpack.c.b16 %v370, %v368
        %v391 = vpack.c.b16 %v371, %v369
        %v392 = vpack.c.b16 %v374, %v372
        %v393 = vpack.c.b16 %v375, %v373
        %v394 = vpack.c.b16 %v378, %v376
        %v395 = vpack.c.b16 %v379, %v377
        %412 = vmatpush.bf16.msra.mxu0 %v394
        %413 = vmatpush.bf16.msra.mxu0 %v392
        %414 = vmatpush.bf16.msra.mxu0 %v390
        %415 = vmatpush.bf16.msra.mxu0 %v388
        %416 = vmatpush.bf16.msra.mxu0 %v386
        %417 = vmatpush.bf16.msra.mxu0 %v384
        %418 = vmatpush.bf16.msra.mxu0 %v382
        %419 = vmatpush.bf16.msra.mxu0 %v380
        %420 = vmatmul.bf16.gmra.mxu0 %v316
        %v421 = vpop.f32.mrf.mxu0
        %v422 = vadd.f32 0.0, %v421
        %v423 = vpop.f32.mrf.mxu0
        %v424 = vadd.f32 0.0, %v423
        %425 = vmatmul.bf16.gmra.mxu0 %v317
        %v426 = vpop.f32.mrf.mxu0
        %v427 = vadd.f32 0.0, %v426
        %v428 = vpop.f32.mrf.mxu0
        %v429 = vadd.f32 0.0, %v428
        %430 = vmatmul.bf16.gmra.mxu0 %v318
        %v431 = vpop.f32.mrf.mxu0
        %v432 = vadd.f32 0.0, %v431
        %v433 = vpop.f32.mrf.mxu0
        %v434 = vadd.f32 0.0, %v433
        %435 = vmatmul.bf16.gmra.mxu0 %v319
        %v436 = vpop.f32.mrf.mxu0
        %v437 = vadd.f32 0.0, %v436
        %v438 = vpop.f32.mrf.mxu0
        %v439 = vadd.f32 0.0, %v438
        %440 = vmatmul.bf16.gmra.mxu0 %v320
        %v441 = vpop.f32.mrf.mxu0
        %v442 = vadd.f32 0.0, %v441
        %v443 = vpop.f32.mrf.mxu0
        %v444 = vadd.f32 0.0, %v443
        %445 = vmatmul.bf16.gmra.mxu0 %v321
        %v446 = vpop.f32.mrf.mxu0
        %v447 = vadd.f32 0.0, %v446
        %v448 = vpop.f32.mrf.mxu0
        %v449 = vadd.f32 0.0, %v448
        %450 = vmatmul.bf16.gmra.mxu0 %v322
        %v451 = vpop.f32.mrf.mxu0
        %v452 = vadd.f32 0.0, %v451
        %v453 = vpop.f32.mrf.mxu0
        %v454 = vadd.f32 0.0, %v453
        %455 = vmatmul.bf16.gmra.mxu0 %v323
        %v456 = vpop.f32.mrf.mxu0
        %v457 = vadd.f32 0.0, %v456
        %v458 = vpop.f32.mrf.mxu0
        %v459 = vadd.f32 0.0, %v458
        %460 = vdwg.mxu0
        %461 = vmatpush.bf16.msra.mxu0 %v395
        %462 = vmatpush.bf16.msra.mxu0 %v393
        %463 = vmatpush.bf16.msra.mxu0 %v391
        %464 = vmatpush.bf16.msra.mxu0 %v389
        %465 = vmatpush.bf16.msra.mxu0 %v387
        %466 = vmatpush.bf16.msra.mxu0 %v385
        %467 = vmatpush.bf16.msra.mxu0 %v383
        %468 = vmatpush.bf16.msra.mxu0 %v381
        %469 = vmatmul.bf16.gmra.mxu0 %v316
        %v470 = vpop.f32.mrf.mxu0
        %v471 = vadd.f32 0.0, %v470
        %v472 = vpop.f32.mrf.mxu0
        %v473 = vadd.f32 0.0, %v472
        %474 = vmatmul.bf16.gmra.mxu0 %v317
        %v475 = vpop.f32.mrf.mxu0
        %v476 = vadd.f32 0.0, %v475
        %v477 = vpop.f32.mrf.mxu0
        %v478 = vadd.f32 0.0, %v477
        %479 = vmatmul.bf16.gmra.mxu0 %v318
        %v480 = vpop.f32.mrf.mxu0
        %v481 = vadd.f32 0.0, %v480
        %v482 = vpop.f32.mrf.mxu0
        %v483 = vadd.f32 0.0, %v482
        %484 = vmatmul.bf16.gmra.mxu0 %v319
        %v485 = vpop.f32.mrf.mxu0
        %v486 = vadd.f32 0.0, %v485
        %v487 = vpop.f32.mrf.mxu0
        %v488 = vadd.f32 0.0, %v487
        %489 = vmatmul.bf16.gmra.mxu0 %v320
        %v490 = vpop.f32.mrf.mxu0
        %v491 = vadd.f32 0.0, %v490
        %v492 = vpop.f32.mrf.mxu0
        %v493 = vadd.f32 0.0, %v492
        %494 = vmatmul.bf16.gmra.mxu0 %v321
        %v495 = vpop.f32.mrf.mxu0
        %v496 = vadd.f32 0.0, %v495
        %v497 = vpop.f32.mrf.mxu0
        %v498 = vadd.f32 0.0, %v497
        %499 = vmatmul.bf16.gmra.mxu0 %v322
        %v500 = vpop.f32.mrf.mxu0
        %v501 = vadd.f32 0.0, %v500
        %v502 = vpop.f32.mrf.mxu0
        %v503 = vadd.f32 0.0, %v502
        %504 = vmatmul.bf16.gmra.mxu0 %v323
        %v505 = vpop.f32.mrf.mxu0
        %v506 = vadd.f32 0.0, %v505
        %v507 = vpop.f32.mrf.mxu0
        %v508 = vadd.f32 0.0, %v507
        %509 = vdwg.mxu0
        %v510 = vld [vmem:[#allocation7] sm:$0x3]
        %v512 = vperm.slane %v510, 0
        %v513 = vperm.slane %v510, 1
        %v516 = vmul.f32 %v422, %v512
        %v517 = vmul.f32 %v471, %v513
        %v518 = vmul.f32 %v424, %v512
        %v519 = vmul.f32 %v473, %v513
        %v520 = vmul.f32 %v427, %v512
        %v521 = vmul.f32 %v476, %v513
        %v522 = vmul.f32 %v429, %v512
        %v523 = vmul.f32 %v478, %v513
        %v524 = vmul.f32 %v432, %v512
        %v525 = vmul.f32 %v481, %v513
        %v526 = vmul.f32 %v434, %v512
        %v527 = vmul.f32 %v483, %v513
        %v528 = vmul.f32 %v437, %v512
        %v529 = vmul.f32 %v486, %v513
        %v530 = vmul.f32 %v439, %v512
        %v531 = vmul.f32 %v488, %v513
        %v532 = vmul.f32 %v442, %v512
        %v533 = vmul.f32 %v491, %v513
        %v534 = vmul.f32 %v444, %v512
        %v535 = vmul.f32 %v493, %v513
        %v536 = vmul.f32 %v447, %v512
        %v537 = vmul.f32 %v496, %v513
        %v538 = vmul.f32 %v449, %v512
        %v539 = vmul.f32 %v498, %v513
        %v540 = vmul.f32 %v452, %v512
        %v541 = vmul.f32 %v501, %v513
        %v542 = vmul.f32 %v454, %v512
        %v543 = vmul.f32 %v503, %v513
        %v544 = vmul.f32 %v457, %v512
        %v545 = vmul.f32 %v506, %v513
        %v546 = vmul.f32 %v459, %v512
        %v547 = vmul.f32 %v508, %v513
        %v548 = vld [vmem:[%s3] sm:$0x3]
        %v550 = vperm.slane %v548, 0
        %v551 = vperm.slane %v548, 1
        %v554 = vadd.f32 %v516, %v550
        %v555 = vadd.f32 %v517, %v551
        %v556 = vadd.f32 %v518, %v550
        %v557 = vadd.f32 %v519, %v551
        %v558 = vadd.f32 %v520, %v550
        %v559 = vadd.f32 %v521, %v551
        %v560 = vadd.f32 %v522, %v550
        %v561 = vadd.f32 %v523, %v551
        %v562 = vadd.f32 %v524, %v550
        %v563 = vadd.f32 %v525, %v551
        %v564 = vadd.f32 %v526, %v550
        %v565 = vadd.f32 %v527, %v551
        %v566 = vadd.f32 %v528, %v550
        %v567 = vadd.f32 %v529, %v551
        %v568 = vadd.f32 %v530, %v550
        %v569 = vadd.f32 %v531, %v551
        %v570 = vadd.f32 %v532, %v550
        %v571 = vadd.f32 %v533, %v551
        %v572 = vadd.f32 %v534, %v550
        %v573 = vadd.f32 %v535, %v551
        %v574 = vadd.f32 %v536, %v550
        %v575 = vadd.f32 %v537, %v551
        %v576 = vadd.f32 %v538, %v550
        %v577 = vadd.f32 %v539, %v551
        %v578 = vadd.f32 %v540, %v550
        %v579 = vadd.f32 %v541, %v551
        %v580 = vadd.f32 %v542, %v550
        %v581 = vadd.f32 %v543, %v551
        %v582 = vadd.f32 %v544, %v550
        %v583 = vadd.f32 %v545, %v551
        %v584 = vadd.f32 %v546, %v550
        %v585 = vadd.f32 %v547, %v551
        %v586 = vmax.f32 %v554, 0.0
        %v587 = vmax.f32 %v555, 0.0
        %v588 = vmax.f32 %v556, 0.0
        %v589 = vmax.f32 %v557, 0.0
        %v590 = vmax.f32 %v558, 0.0
        %v591 = vmax.f32 %v559, 0.0
        %v592 = vmax.f32 %v560, 0.0
        %v593 = vmax.f32 %v561, 0.0
        %v594 = vmax.f32 %v562, 0.0
        %v595 = vmax.f32 %v563, 0.0
        %v596 = vmax.f32 %v564, 0.0
        %v597 = vmax.f32 %v565, 0.0
        %v598 = vmax.f32 %v566, 0.0
        %v599 = vmax.f32 %v567, 0.0
        %v600 = vmax.f32 %v568, 0.0
        %v601 = vmax.f32 %v569, 0.0
        %v602 = vmax.f32 %v570, 0.0
        %v603 = vmax.f32 %v571, 0.0
        %v604 = vmax.f32 %v572, 0.0
        %v605 = vmax.f32 %v573, 0.0
        %v606 = vmax.f32 %v574, 0.0
        %v607 = vmax.f32 %v575, 0.0
        %v608 = vmax.f32 %v576, 0.0
        %v609 = vmax.f32 %v577, 0.0
        %v610 = vmax.f32 %v578, 0.0
        %v611 = vmax.f32 %v579, 0.0
        %v612 = vmax.f32 %v580, 0.0
        %v613 = vmax.f32 %v581, 0.0
        %v614 = vmax.f32 %v582, 0.0
        %v615 = vmax.f32 %v583, 0.0
        %v616 = vmax.f32 %v584, 0.0
        %v617 = vmax.f32 %v585, 0.0
        %v618 = vpack.c.bf16 %v586, %v586
        %v619 = vpack.c.bf16 %v588, %v588
        %v620 = vpack.c.bf16 %v590, %v590
        %v621 = vpack.c.bf16 %v592, %v592
        %v622 = vpack.c.bf16 %v594, %v594
        %v623 = vpack.c.bf16 %v596, %v596
        %v624 = vpack.c.bf16 %v598, %v598
        %v625 = vpack.c.bf16 %v600, %v600
        %v626 = vpack.c.bf16 %v602, %v602
        %v627 = vpack.c.bf16 %v604, %v604
        %v628 = vpack.c.bf16 %v606, %v606
        %v629 = vpack.c.bf16 %v608, %v608
        %v630 = vpack.c.bf16 %v610, %v610
        %v631 = vpack.c.bf16 %v612, %v612
        %v632 = vpack.c.bf16 %v614, %v614
        %v633 = vpack.c.bf16 %v616, %v616
        %634 = vst [vmem:[%s249] sm:$0xf] %v618
        %635 = vst [vmem:[%s249 + $0x4] sm:$0xf] %v619
        %636 = vst [vmem:[%s249 + $0x10] sm:$0xf] %v620
        %637 = vst [vmem:[%s249 + $0x14] sm:$0xf] %v621
        %638 = vst [vmem:[%s249 + $0x20] sm:$0xf] %v622
        %639 = vst [vmem:[%s249 + $0x24] sm:$0xf] %v623
        %640 = vst [vmem:[%s249 + $0x30] sm:$0xf] %v624
        %641 = vst [vmem:[%s249 + $0x34] sm:$0xf] %v625
        %642 = vst [vmem:[%s249 + $0x40] sm:$0xf] %v626
        %643 = vst [vmem:[%s249 + $0x44] sm:$0xf] %v627
        %644 = vst [vmem:[%s249 + $0x50] sm:$0xf] %v628
        %645 = vst [vmem:[%s249 + $0x54] sm:$0xf] %v629
        %646 = vst [vmem:[%s249 + $0x60] sm:$0xf] %v630
        %647 = vst [vmem:[%s249 + $0x64] sm:$0xf] %v631
        %648 = vst [vmem:[%s249 + $0x70] sm:$0xf] %v632
        %649 = vst [vmem:[%s249 + $0x74] sm:$0xf] %v633
        %v650 = vpack.c.bf16 %v587, %v587
        %v651 = vpack.c.bf16 %v589, %v589
        %v652 = vpack.c.bf16 %v591, %v591
        %v653 = vpack.c.bf16 %v593, %v593
        %v654 = vpack.c.bf16 %v595, %v595
        %v655 = vpack.c.bf16 %v597, %v597
        %v656 = vpack.c.bf16 %v599, %v599
        %v657 = vpack.c.bf16 %v601, %v601
        %v658 = vpack.c.bf16 %v603, %v603
        %v659 = vpack.c.bf16 %v605, %v605
        %v660 = vpack.c.bf16 %v607, %v607
        %v661 = vpack.c.bf16 %v609, %v609
        %v662 = vpack.c.bf16 %v611, %v611
        %v663 = vpack.c.bf16 %v613, %v613
        %v664 = vpack.c.bf16 %v615, %v615
        %v665 = vpack.c.bf16 %v617, %v617
        %s666 = scalar_lea.vmem %s249, 8 [#allocation8]
        %667 = vst [vmem:[%s666] sm:$0xf] %v650
        %668 = vst [vmem:[%s666 + $0x4] sm:$0xf] %v651
        %669 = vst [vmem:[%s666 + $0x10] sm:$0xf] %v652
        %670 = vst [vmem:[%s666 + $0x14] sm:$0xf] %v653
        %671 = vst [vmem:[%s666 + $0x20] sm:$0xf] %v654
        %672 = vst [vmem:[%s666 + $0x24] sm:$0xf] %v655
        %673 = vst [vmem:[%s666 + $0x30] sm:$0xf] %v656
        %674 = vst [vmem:[%s666 + $0x34] sm:$0xf] %v657
        %675 = vst [vmem:[%s666 + $0x40] sm:$0xf] %v658
        %676 = vst [vmem:[%s666 + $0x44] sm:$0xf] %v659
        %677 = vst [vmem:[%s666 + $0x50] sm:$0xf] %v660
        %678 = vst [vmem:[%s666 + $0x54] sm:$0xf] %v661
        %679 = vst [vmem:[%s666 + $0x60] sm:$0xf] %v662
        %680 = vst [vmem:[%s666 + $0x64] sm:$0xf] %v663
        %681 = vst [vmem:[%s666 + $0x70] sm:$0xf] %v664
        %682 = vst [vmem:[%s666 + $0x74] sm:$0xf] %v665
        %s683 = sand.u32 %s119, 1
        %s684 = scalar_lea.sflag [#allocation4], %s683
        %s685 = sand.u32 %s119, 1
        %s686 = smul.addr %s685, 128
        %s687 = scalar_lea.vmem [#allocation8], %s686
        // Predicated region
        $region49: #{tpu_custom_call.1} parent=35 // pred_check
          %p688 = pneg %p129
        $region50: #{tpu_custom_call.1} parent=35 // pred_check_branch
          %690 = sbr.rel (%p688) target = $region52
        $region51: #{tpu_custom_call.1} parent=35 // pred_region
          %s691 = smul.u32 8, %s22
          %693 = vsyncadd %s684, 0
          %s694 = smul.addr %s691, 4
          %s695 = smul.addr %s694, 4
          %s696 = scalar_lea.hbm %s4, %s695
          %s697 = sshll.u32 %s687, 4
          %s698 = int_to_ptr.vmem [resolvable:$true] %s697
          %s699 = sshll.u32 %s696, 4
          %s700 = int_to_ptr.hbm [resolvable:$true] %s699
          %705 = dma.vmem_to_hbm [thread:$0]  %s698, 2048, %s700, %s684, 64, 64, 4
        $region52: #{tpu_custom_call.1} parent=35 // pred_fallthru
          _
      $region36: #{tpu_custom_call.1} parent=5 // pred_fallthru
        _
      %p706 = scmp.le.s32.totalorder 2, %s17
      // Predicated region
      $region53: #{tpu_custom_call.1} parent=5 // pred_check
        %p707 = pneg %p706
      $region54: #{tpu_custom_call.1} parent=5 // pred_check_branch
        %709 = sbr.rel (%p707) target = $region56
      $region55: #{tpu_custom_call.1} parent=5 // pred_region
        %s710 = ssub.s32 %s17, 2
        // Predicated region
        $region57: #{tpu_custom_call.1} parent=55 // pred_check
          %p711 = pneg %p135
        $region58: #{tpu_custom_call.1} parent=55 // pred_check_branch
          %713 = sbr.rel (%p711) target = $region60
        $region59: #{tpu_custom_call.1} parent=55 // pred_region
          %s714 = sand.u32 %s120, 1
          %s715 = scalar_lea.sflag [#allocation4], %s714
          %s716 = sand.u32 %s120, 1
          %s717 = smul.addr %s716, 128
          %s718 = scalar_lea.vmem [#allocation8], %s717
          %720 = dma.done %s715, 2048
        $region60: #{tpu_custom_call.1} parent=55 // pred_fallthru
          _
      $region56: #{tpu_custom_call.1} parent=5 // pred_fallthru
        _
    $region6: #{tpu_custom_call.1} parent=1 // loop_footer
      %s21 = sadd.s32 1, %s17
    $region7: #{tpu_custom_call.1} parent=1 // loop_footer_branch
      %16 = sbr.rel target = $region3
    $region8: #{tpu_custom_call.1} parent=1 // loop_exit
      _
    %721 = vsyncpa [#allocation3], 1
    %s722 = scalar_lea.sflag [#allocation3], 1
    %723 = vsyncpa %s722, 1
    %724 = vsyncpa [#allocation6], 1
    %725 = vsyncpa [#allocation4], 1
    %s726 = scalar_lea.sflag [#allocation4], 1
    %727 = vsyncpa %s726, 1

</llo_original>
